<compile_context>
chip_gen: v6e
topology: v6e:2x2x1
jax: 0.10.0
libtpu: 0.0.40
codegen_flags: <defaults>
</compile_context>

<pallas_src>
import jax
import jax.numpy as jnp
from jax.experimental import pallas as pl
from jax.experimental.pallas import tpu as pltpu

# rgb -> xyz matrix from the module.
_M = ((0.412453, 0.35758, 0.180423),
      (0.212671, 0.71516, 0.072169),
      (0.019334, 0.119193, 0.950227))
_M_ROWSUM = tuple(sum(row) for row in _M)
# Folded constants: x_i = sum_j M[i][j] * (img_j + 1) * 0.5 / rowsum_i
#                       = sum_j M'[i][j] * img_j + 0.5
_MP = tuple(tuple(_M[i][j] / (2.0 * _M_ROWSUM[i]) for j in range(3))
            for i in range(3))
_EPS = 0.008856

_LANES = 128
_SUB = 16          # rows per inner-loop slice == min row granularity (bf16 tile)
_N_PART = 6        # fd1, fd2, fmask, rd1, rd2, rmask partial sums
_UNROLL = 4


def _f_lab(x):
    # f(t) = t^(1/3) if t > 0.008856 else 7.787*t + 0.137931
    # No clamp: for x <= EPS (incl. tiny negatives from rounding when img==-1)
    # the cbrt branch is never selected, so NaN/inf there cannot leak.
    cbrt = jnp.exp(jnp.log(x) * (1.0 / 3.0))
    return jnp.where(x > _EPS, cbrt, 7.787 * x + 0.137931)


def _ab_diffs(r, g, b, mask):
    # r, g, b: (SUB, 128) slices in the generator's [-1, 1] range (any float
    # dtype, cast to f32 here); mask: (SUB, 128) f32.
    r = r.astype(jnp.float32)
    g = g.astype(jnp.float32)
    b = b.astype(jnp.float32)
    x = _MP[0][0] * r + _MP[0][1] * g + _MP[0][2] * b + 0.5
    y = _MP[1][0] * r + _MP[1][1] * g + _MP[1][2] * b + 0.5
    z = _MP[2][0] * r + _MP[2][1] * g + _MP[2][2] * b + 0.5
    fx, fy, fz = _f_lab(x), _f_lab(y), _f_lab(z)
    # a = 500*(fx-fy), b = 200*(fy-fz); the 500/200 scales and /mask_sum are
    # applied once per image in the wrapper.  L channel is never used.
    return (fx - fy) * mask, (fy - fz) * mask


def _hair_avg_lab_kernel(fake_ref, real_ref, mf_ref, mr_ref, out_ref):
    # Grid = (batch, parallel_half, chunk).  out_ref (the (6*_SUB, 128) block)
    # is resident across the chunk axis and serves as the accumulator.
    j = pl.program_id(2)

    @pl.when(j == 0)
    def _():
        out_ref[...] = jnp.zeros(out_ref.shape, out_ref.dtype)

    tr = fake_ref.shape[1]
    n_sub = tr // _SUB

    def body(s, carry):
        fd1, fd2, fms, rd1, rd2, rms = carry
        off = pl.multiple_of(s * _SUB, _SUB)
        sl = pl.ds(off, _SUB)
        fm = mf_ref[0, sl, :].astype(jnp.float32)
        rm = mr_ref[0, sl, :].astype(jnp.float32)
        f1, f2 = _ab_diffs(fake_ref[0, sl, :], fake_ref[1, sl, :],
                           fake_ref[2, sl, :], fm)
        r1, r2 = _ab_diffs(real_ref[0, sl, :], real_ref[1, sl, :],
                           real_ref[2, sl, :], rm)
        return (fd1 + f1, fd2 + f2, fms + fm, rd1 + r1, rd2 + r2, rms + rm)

    zeros = jnp.zeros((_SUB, _LANES), jnp.float32)
    sums = jax.lax.fori_loop(0, n_sub, body, (zeros,) * _N_PART,
                             unroll=min(_UNROLL, n_sub))

    for k in range(_N_PART):
        out_ref[k * _SUB:(k + 1) * _SUB, :] += sums[k]


def _choose_chunking(rows_p, max_rows, want_split):
    """Pick (tr, num_chunks, par) with tr * num_chunks == rows_p, tr % _SUB == 0.

    Prefers an even chunk count when `want_split` so the chunk axis can be
    divided across two parallel halves (v7x megacore at batch==1)."""
    nc_min = max(1, -(-rows_p // max_rows))
    first = None
    nc = nc_min
    while nc * _SUB <= rows_p:
        tr = rows_p // nc
        if rows_p % nc == 0 and tr % _SUB == 0 and tr <= max_rows:
            if first is None:
                first = nc
                if not want_split:
                    break
            if nc % 2 == 0:
                return rows_p // nc, nc, 2
        nc += 1
    assert first is not None  # rows_p is a multiple of _SUB -> nc=rows_p//_SUB works
    return rows_p // first, first, 1


def hair_avg_lab_loss(fake, real, mask_fake, mask_real, *, max_rows_per_chunk=None):
    n, c, h, w = fake.shape
    assert c == 3
    total = h * w

    def to_kernel_dtype(x):
        if x.dtype in (jnp.float32, jnp.bfloat16):
            return x
        # bool / int masks, f16, f64 ... -> bf16 (exact for 0/1 masks,
        # halves/quarters HBM bytes vs f32).
        return x.astype(jnp.bfloat16)

    fake, real = to_kernel_dtype(fake), to_kernel_dtype(real)
    mask_fake, mask_real = to_kernel_dtype(mask_fake), to_kernel_dtype(mask_real)

    itemsize = max(x.dtype.itemsize for x in (fake, real, mask_fake, mask_real))
    if max_rows_per_chunk is None:
        # ~8 MiB double-buffered per step: fits v5e's 16 MiB scoped-VMEM
        # default and v7x's 64 MiB physical VMEM without flags.
        max_rows_per_chunk = 2048 if itemsize <= 2 else 1024

    rows = -(-total // _LANES)                       # ceil(total / 128)
    rows_p = -(-rows // _SUB) * _SUB                 # multiple of 16
    tr, nc, par = _choose_chunking(rows_p, max_rows_per_chunk,
                                   want_split=(n == 1))
    cph = nc // par                                  # chunks per parallel half

    def prep(x, ch):
        # Lane-dense view (N, ch, rows_p, 128).  Free reshape when H*W is a
        # multiple of _SUB*128 (=2048, true for 128/256/512-px images);
        # otherwise a single zero-pad copy.  Padded mask entries are 0 so the
        # padding never biases the sums.
        flat = x.reshape(n, ch, total)
        pad = rows_p * _LANES - total
        if pad:
            flat = jnp.pad(flat, ((0, 0), (0, 0), (0, pad)))
        return flat.reshape(n, ch, rows_p, _LANES)

    fake_p, real_p = prep(fake, 3), prep(real, 3)
    mf_p, mr_p = prep(mask_fake, 1), prep(mask_real, 1)

    img_spec = pl.BlockSpec((None, 3, tr, _LANES),
                            lambda i, p, j: (i, 0, p * cph + j, 0))
    msk_spec = pl.BlockSpec((None, 1, tr, _LANES),
                            lambda i, p, j: (i, 0, p * cph + j, 0))
    out_spec = pl.BlockSpec((None, None, _N_PART * _SUB, _LANES),
                            lambda i, p, j: (i, p, 0, 0))

    raw = pl.pallas_call(
        _hair_avg_lab_kernel,
        out_shape=jax.ShapeDtypeStruct((n, par, _N_PART * _SUB, _LANES),
                                       jnp.float32),
        grid_spec=pltpu.PrefetchScalarGridSpec(
            num_scalar_prefetch=0,
            grid=(n, par, cph),
            in_specs=[img_spec, img_spec, msk_spec, msk_spec],
            out_specs=out_spec,
        ),
        compiler_params=pltpu.CompilerParams(
            dimension_semantics=("parallel", "parallel", "arbitrary")),
    )(fake_p, real_p, mf_p, mr_p)

    # Tiny epilogue in plain JAX: cross-half / cross-lane collapse, the
    # mask_sum==0 -> 1 clamp, the 500/200 Lab scales, and the L1 mean.
    sums = raw.reshape(n, par, _N_PART, _SUB, _LANES).sum(axis=(1, 3, 4))  # (N,6)
    fd1, fd2, fms, rd1, rd2, rms = (sums[:, k] for k in range(_N_PART))
    fms = jnp.where(fms == 0.0, 1.0, fms)
    rms = jnp.where(rms == 0.0, 1.0, rms)
    fa, fb = 500.0 * fd1 / fms, 200.0 * fd2 / fms
    ra, rb = 500.0 * rd1 / rms, 200.0 * rd2 / rms
    return (jnp.sum(jnp.abs(fa - ra)) + jnp.sum(jnp.abs(fb - rb))) / (2.0 * n)


def _reference_loss(fake, real, mask_fake, mask_real):
    # Pure-JAX mirror of the PyTorch forward (balance_Lab=False path).
    M = jnp.array(_M, dtype=jnp.float32)

    def rgb2xyz(img):
        rgb = (img + 1.0) / 2.0
        xyz = jnp.einsum('nc,bchw->bnhw', M, rgb)
        return xyz / M.sum(axis=1)[None, :, None, None]

    def f(t):
        return jnp.where(t > _EPS, jnp.cbrt(t), 7.787 * t + 0.137931)

    def xyz2lab(xyz):
        fx = f(xyz)
        y = xyz[:, 1]
        L = jnp.where(y > _EPS, 116.0 * fx[:, 1] - 16.0, 903.3 * y)
        a = 500.0 * (fx[:, 0] - fx[:, 1])
        b = 200.0 * (fx[:, 1] - fx[:, 2])
        return jnp.stack([L, a, b], axis=1)

    def avg(lab, mask):
        s = jnp.sum(lab * mask, axis=(2, 3), keepdims=True)
        ms = jnp.sum(mask, axis=(2, 3), keepdims=True)
        ms = jnp.where(ms == 0.0, 1.0, ms)
        return s / ms

    fl = avg(xyz2lab(rgb2xyz(fake)), mask_fake)
    rl = avg(xyz2lab(rgb2xyz(real)), mask_real)
    return jnp.mean(jnp.abs(fl[:, 1:] - rl[:, 1:]))


if __name__ == "__main__":
    key = jax.random.PRNGKey(0)

    # Test 1: f32 inputs, small batch (exercises the pad path at tiny sizes).
    k1, k2, k3, k4, key = jax.random.split(key, 5)
    N, C, H, W = 2, 3, 16, 16
    fake = jnp.tanh(jax.random.normal(k1, (N, C, H, W), jnp.float32))
    real = jnp.tanh(jax.random.normal(k2, (N, C, H, W), jnp.float32))
    mask_fake = jax.random.bernoulli(k3, 0.5, (N, 1, H, W)).astype(jnp.float32)
    mask_real = jax.random.bernoulli(k4, 0.5, (N, 1, H, W)).astype(jnp.float32)

    loss = jax.block_until_ready(
        hair_avg_lab_loss(fake, real, mask_fake, mask_real))
    ref = _reference_loss(fake, real, mask_fake, mask_real)
    assert jnp.isfinite(loss), loss
    assert abs(float(loss) - float(ref)) < 1e-3, (float(loss), float(ref))

    # Test 2: non-multiple spatial size (zero-padding) and an all-zero mask for
    # one image (exercises the mask_sum==0 -> 1 clamp).
    k1, k2, k3, k4, key = jax.random.split(key, 5)
    N2, H2, W2 = 2, 20, 20
    fake2 = jnp.tanh(jax.random.normal(k1, (N2, 3, H2, W2), jnp.float32))
    real2 = jnp.tanh(jax.random.normal(k2, (N2, 3, H2, W2), jnp.float32))
    mf2 = jax.random.bernoulli(k3, 0.5, (N2, 1, H2, W2)).astype(jnp.float32)
    mf2 = mf2.at[0].set(0.0)
    mr2 = jax.random.bernoulli(k4, 0.5, (N2, 1, H2, W2)).astype(jnp.float32)

    loss2 = jax.block_until_ready(hair_avg_lab_loss(fake2, real2, mf2, mr2))
    ref2 = _reference_loss(fake2, real2, mf2, mr2)
    assert jnp.isfinite(loss2), loss2
    assert abs(float(loss2) - float(ref2)) < 1e-3, (float(loss2), float(ref2))

    # Test 3: bf16 inputs, batch==1 (2-way parallel chunk split), small
    # max_rows_per_chunk forces multi-chunk accumulation; H*W % 2048 == 0 so
    # the wrapper does no padding copy.  Reference is fed the same
    # bf16-quantized values so only kernel math is being checked.
    k1, k2, k3, k4, key = jax.random.split(key, 5)
    N3, H3, W3 = 1, 128, 128
    fake3 = jnp.tanh(jax.random.normal(k1, (N3, 3, H3, W3), jnp.float32)).astype(jnp.bfloat16)
    real3 = jnp.tanh(jax.random.normal(k2, (N3, 3, H3, W3), jnp.float32)).astype(jnp.bfloat16)
    mf3 = jax.random.bernoulli(k3, 0.5, (N3, 1, H3, W3)).astype(jnp.bfloat16)
    mr3 = jax.random.bernoulli(k4, 0.5, (N3, 1, H3, W3)).astype(jnp.bfloat16)

    loss3 = jax.block_until_ready(
        hair_avg_lab_loss(fake3, real3, mf3, mr3, max_rows_per_chunk=32))
    ref3 = _reference_loss(fake3.astype(jnp.float32), real3.astype(jnp.float32),
                           mf3.astype(jnp.float32), mr3.astype(jnp.float32))
    assert jnp.isfinite(loss3), loss3
    assert abs(float(loss3) - float(ref3)) < 1e-3, (float(loss3), float(ref3))

    print("KERNEL_OK")
</pallas_src>

<mosaic_0001>
module attributes {stable_mosaic.version = 11 : i64} {
  func.func @_hair_avg_lab_kernel(%arg0: i32, %arg1: i32, %arg2: i32, %arg3: memref<1x3x16x128xf32, #tpu.memory_space<vmem>>, %arg4: memref<1x3x16x128xf32, #tpu.memory_space<vmem>>, %arg5: memref<1x1x16x128xf32, #tpu.memory_space<vmem>>, %arg6: memref<1x1x16x128xf32, #tpu.memory_space<vmem>>, %arg7: memref<1x1x96x128xf32, #tpu.memory_space<vmem>>) attributes {dimension_semantics = [#tpu.dimension_semantics<parallel>, #tpu.dimension_semantics<parallel>, #tpu.dimension_semantics<arbitrary>], iteration_bounds = array<i64: 2, 1, 1>, scalar_prefetch = 0 : i64, scratch_operands = 0 : i64, tpu.core_type = #tpu.core_type<tc>, window_params = [{transform_indices = @transform_0, window_bounds = array<i64: 1, 3, 16, 128>}, {transform_indices = @transform_1, window_bounds = array<i64: 1, 3, 16, 128>}, {transform_indices = @transform_2, window_bounds = array<i64: 1, 1, 16, 128>}, {transform_indices = @transform_3, window_bounds = array<i64: 1, 1, 16, 128>}, {transform_indices = @transform_4, window_bounds = array<i64: 1, 1, 96, 128>}]} {
    %c0_i32 = arith.constant 0 : i32
    %0 = arith.cmpi eq, %arg2, %c0_i32 : i32
    %1 = arith.extui %0 : i1 to i32
    %c0_i32_0 = arith.constant 0 : i32
    %2 = arith.cmpi ne, %1, %c0_i32_0 : i32
    scf.if %2 {
      %cst_114 = arith.constant 0.000000e+00 : f32
      %206 = vector.broadcast %cst_114 : f32 to vector<96x128xf32>
      %c0_115 = arith.constant 0 : index
      %c0_116 = arith.constant 0 : index
      %c0_117 = arith.constant 0 : index
      %c0_118 = arith.constant 0 : index
      %207 = vector.load %arg7[%c0_115, %c0_116, %c0_117, %c0_118] : memref<1x1x96x128xf32, #tpu.memory_space<vmem>>, vector<1x1x96x128xf32>
      %208 = vector.shape_cast %207 : vector<1x1x96x128xf32> to vector<96x128xf32>
      %209 = vector.shape_cast %206 : vector<96x128xf32> to vector<1x1x96x128xf32>
      tpu.vector_store %arg7[%c0_115, %c0_116, %c0_117, %c0_118], %209 {strides = array<i32>} : memref<1x1x96x128xf32, #tpu.memory_space<vmem>>, vector<1x1x96x128xf32>,
    } else {
    }
    %cst = arith.constant 0.000000e+00 : f32
    %3 = vector.broadcast %cst : f32 to vector<16x128xf32>
    %c0_i32_1 = arith.constant 0 : i32
    %c16_i32 = arith.constant 16 : i32
    %4 = arith.muli %c0_i32_1, %c16_i32 : i32
    %5 = tpu.assume_multiple %4, 16 : i32
    %c0 = arith.constant 0 : index
    %c0_2 = arith.constant 0 : index
    %6 = arith.index_cast %5 : i32 to index
    %c0_3 = arith.constant 0 : index
    %7 = vector.load %arg5[%c0, %c0_2, %6, %c0_3] : memref<1x1x16x128xf32, #tpu.memory_space<vmem>>, vector<1x1x16x128xf32>
    %8 = vector.shape_cast %7 : vector<1x1x16x128xf32> to vector<16x128xf32>
    %c0_4 = arith.constant 0 : index
    %c0_5 = arith.constant 0 : index
    %9 = arith.index_cast %5 : i32 to index
    %c0_6 = arith.constant 0 : index
    %10 = vector.load %arg6[%c0_4, %c0_5, %9, %c0_6] : memref<1x1x16x128xf32, #tpu.memory_space<vmem>>, vector<1x1x16x128xf32>
    %11 = vector.shape_cast %10 : vector<1x1x16x128xf32> to vector<16x128xf32>
    %c0_7 = arith.constant 0 : index
    %c0_8 = arith.constant 0 : index
    %12 = arith.index_cast %5 : i32 to index
    %c0_9 = arith.constant 0 : index
    %13 = vector.load %arg3[%c0_7, %c0_8, %12, %c0_9] : memref<1x3x16x128xf32, #tpu.memory_space<vmem>>, vector<1x1x16x128xf32>
    %14 = vector.shape_cast %13 : vector<1x1x16x128xf32> to vector<16x128xf32>
    %c0_10 = arith.constant 0 : index
    %c1 = arith.constant 1 : index
    %15 = arith.index_cast %5 : i32 to index
    %c0_11 = arith.constant 0 : index
    %16 = vector.load %arg3[%c0_10, %c1, %15, %c0_11] : memref<1x3x16x128xf32, #tpu.memory_space<vmem>>, vector<1x1x16x128xf32>
    %17 = vector.shape_cast %16 : vector<1x1x16x128xf32> to vector<16x128xf32>
    %c0_12 = arith.constant 0 : index
    %c2 = arith.constant 2 : index
    %18 = arith.index_cast %5 : i32 to index
    %c0_13 = arith.constant 0 : index
    %19 = vector.load %arg3[%c0_12, %c2, %18, %c0_13] : memref<1x3x16x128xf32, #tpu.memory_space<vmem>>, vector<1x1x16x128xf32>
    %20 = vector.shape_cast %19 : vector<1x1x16x128xf32> to vector<16x128xf32>
    %cst_14 = arith.constant 0.216976374 : f32
    %21 = vector.broadcast %cst_14 : f32 to vector<16x128xf32>
    %22 = arith.mulf %21, %14 : vector<16x128xf32>
    %cst_15 = arith.constant 0.188109711 : f32
    %23 = vector.broadcast %cst_15 : f32 to vector<16x128xf32>
    %24 = arith.mulf %23, %17 : vector<16x128xf32>
    %25 = arith.addf %22, %24 : vector<16x128xf32>
    %cst_16 = arith.constant 0.0949139148 : f32
    %26 = vector.broadcast %cst_16 : f32 to vector<16x128xf32>
    %27 = arith.mulf %26, %20 : vector<16x128xf32>
    %28 = arith.addf %25, %27 : vector<16x128xf32>
    %cst_17 = arith.constant 5.000000e-01 : f32
    %29 = vector.broadcast %cst_17 : f32 to vector<16x128xf32>
    %30 = arith.addf %28, %29 : vector<16x128xf32>
    %cst_18 = arith.constant 0.106335498 : f32
    %31 = vector.broadcast %cst_18 : f32 to vector<16x128xf32>
    %32 = arith.mulf %31, %14 : vector<16x128xf32>
    %cst_19 = arith.constant 3.575800e-01 : f32
    %33 = vector.broadcast %cst_19 : f32 to vector<16x128xf32>
    %34 = arith.mulf %33, %17 : vector<16x128xf32>
    %35 = arith.addf %32, %34 : vector<16x128xf32>
    %cst_20 = arith.constant 3.608450e-02 : f32
    %36 = vector.broadcast %cst_20 : f32 to vector<16x128xf32>
    %37 = arith.mulf %36, %20 : vector<16x128xf32>
    %38 = arith.addf %35, %37 : vector<16x128xf32>
    %cst_21 = arith.constant 5.000000e-01 : f32
    %39 = vector.broadcast %cst_21 : f32 to vector<16x128xf32>
    %40 = arith.addf %38, %39 : vector<16x128xf32>
    %cst_22 = arith.constant 0.00887895748 : f32
    %41 = vector.broadcast %cst_22 : f32 to vector<16x128xf32>
    %42 = arith.mulf %41, %14 : vector<16x128xf32>
    %cst_23 = arith.constant 0.0547382608 : f32
    %43 = vector.broadcast %cst_23 : f32 to vector<16x128xf32>
    %44 = arith.mulf %43, %17 : vector<16x128xf32>
    %45 = arith.addf %42, %44 : vector<16x128xf32>
    %cst_24 = arith.constant 0.436382771 : f32
    %46 = vector.broadcast %cst_24 : f32 to vector<16x128xf32>
    %47 = arith.mulf %46, %20 : vector<16x128xf32>
    %48 = arith.addf %45, %47 : vector<16x128xf32>
    %cst_25 = arith.constant 5.000000e-01 : f32
    %49 = vector.broadcast %cst_25 : f32 to vector<16x128xf32>
    %50 = arith.addf %48, %49 : vector<16x128xf32>
    %51 = math.log %30 : vector<16x128xf32>
    %cst_26 = arith.constant 0.333333343 : f32
    %52 = vector.broadcast %cst_26 : f32 to vector<16x128xf32>
    %53 = arith.mulf %51, %52 : vector<16x128xf32>
    %54 = math.exp %53 : vector<16x128xf32>
    %cst_27 = arith.constant 8.856000e-03 : f32
    %55 = vector.broadcast %cst_27 : f32 to vector<16x128xf32>
    %56 = arith.cmpf ogt, %30, %55 : vector<16x128xf32>
    %cst_28 = arith.constant 7.787000e+00 : f32
    %57 = vector.broadcast %cst_28 : f32 to vector<16x128xf32>
    %58 = arith.mulf %57, %30 : vector<16x128xf32>
    %cst_29 = arith.constant 1.379310e-01 : f32
    %59 = vector.broadcast %cst_29 : f32 to vector<16x128xf32>
    %60 = arith.addf %58, %59 : vector<16x128xf32>
    %61 = arith.select %56, %54, %60 : vector<16x128xi1>, vector<16x128xf32>
    %62 = math.log %40 : vector<16x128xf32>
    %cst_30 = arith.constant 0.333333343 : f32
    %63 = vector.broadcast %cst_30 : f32 to vector<16x128xf32>
    %64 = arith.mulf %62, %63 : vector<16x128xf32>
    %65 = math.exp %64 : vector<16x128xf32>
    %cst_31 = arith.constant 8.856000e-03 : f32
    %66 = vector.broadcast %cst_31 : f32 to vector<16x128xf32>
    %67 = arith.cmpf ogt, %40, %66 : vector<16x128xf32>
    %cst_32 = arith.constant 7.787000e+00 : f32
    %68 = vector.broadcast %cst_32 : f32 to vector<16x128xf32>
    %69 = arith.mulf %68, %40 : vector<16x128xf32>
    %cst_33 = arith.constant 1.379310e-01 : f32
    %70 = vector.broadcast %cst_33 : f32 to vector<16x128xf32>
    %71 = arith.addf %69, %70 : vector<16x128xf32>
    %72 = arith.select %67, %65, %71 : vector<16x128xi1>, vector<16x128xf32>
    %73 = math.log %50 : vector<16x128xf32>
    %cst_34 = arith.constant 0.333333343 : f32
    %74 = vector.broadcast %cst_34 : f32 to vector<16x128xf32>
    %75 = arith.mulf %73, %74 : vector<16x128xf32>
    %76 = math.exp %75 : vector<16x128xf32>
    %cst_35 = arith.constant 8.856000e-03 : f32
    %77 = vector.broadcast %cst_35 : f32 to vector<16x128xf32>
    %78 = arith.cmpf ogt, %50, %77 : vector<16x128xf32>
    %cst_36 = arith.constant 7.787000e+00 : f32
    %79 = vector.broadcast %cst_36 : f32 to vector<16x128xf32>
    %80 = arith.mulf %79, %50 : vector<16x128xf32>
    %cst_37 = arith.constant 1.379310e-01 : f32
    %81 = vector.broadcast %cst_37 : f32 to vector<16x128xf32>
    %82 = arith.addf %80, %81 : vector<16x128xf32>
    %83 = arith.select %78, %76, %82 : vector<16x128xi1>, vector<16x128xf32>
    %84 = arith.subf %61, %72 : vector<16x128xf32>
    %85 = arith.mulf %84, %8 : vector<16x128xf32>
    %86 = arith.subf %72, %83 : vector<16x128xf32>
    %87 = arith.mulf %86, %8 : vector<16x128xf32>
    %c0_38 = arith.constant 0 : index
    %c0_39 = arith.constant 0 : index
    %88 = arith.index_cast %5 : i32 to index
    %c0_40 = arith.constant 0 : index
    %89 = vector.load %arg4[%c0_38, %c0_39, %88, %c0_40] : memref<1x3x16x128xf32, #tpu.memory_space<vmem>>, vector<1x1x16x128xf32>
    %90 = vector.shape_cast %89 : vector<1x1x16x128xf32> to vector<16x128xf32>
    %c0_41 = arith.constant 0 : index
    %c1_42 = arith.constant 1 : index
    %91 = arith.index_cast %5 : i32 to index
    %c0_43 = arith.constant 0 : index
    %92 = vector.load %arg4[%c0_41, %c1_42, %91, %c0_43] : memref<1x3x16x128xf32, #tpu.memory_space<vmem>>, vector<1x1x16x128xf32>
    %93 = vector.shape_cast %92 : vector<1x1x16x128xf32> to vector<16x128xf32>
    %c0_44 = arith.constant 0 : index
    %c2_45 = arith.constant 2 : index
    %94 = arith.index_cast %5 : i32 to index
    %c0_46 = arith.constant 0 : index
    %95 = vector.load %arg4[%c0_44, %c2_45, %94, %c0_46] : memref<1x3x16x128xf32, #tpu.memory_space<vmem>>, vector<1x1x16x128xf32>
    %96 = vector.shape_cast %95 : vector<1x1x16x128xf32> to vector<16x128xf32>
    %cst_47 = arith.constant 0.216976374 : f32
    %97 = vector.broadcast %cst_47 : f32 to vector<16x128xf32>
    %98 = arith.mulf %97, %90 : vector<16x128xf32>
    %cst_48 = arith.constant 0.188109711 : f32
    %99 = vector.broadcast %cst_48 : f32 to vector<16x128xf32>
    %100 = arith.mulf %99, %93 : vector<16x128xf32>
    %101 = arith.addf %98, %100 : vector<16x128xf32>
    %cst_49 = arith.constant 0.0949139148 : f32
    %102 = vector.broadcast %cst_49 : f32 to vector<16x128xf32>
    %103 = arith.mulf %102, %96 : vector<16x128xf32>
    %104 = arith.addf %101, %103 : vector<16x128xf32>
    %cst_50 = arith.constant 5.000000e-01 : f32
    %105 = vector.broadcast %cst_50 : f32 to vector<16x128xf32>
    %106 = arith.addf %104, %105 : vector<16x128xf32>
    %cst_51 = arith.constant 0.106335498 : f32
    %107 = vector.broadcast %cst_51 : f32 to vector<16x128xf32>
    %108 = arith.mulf %107, %90 : vector<16x128xf32>
    %cst_52 = arith.constant 3.575800e-01 : f32
    %109 = vector.broadcast %cst_52 : f32 to vector<16x128xf32>
    %110 = arith.mulf %109, %93 : vector<16x128xf32>
    %111 = arith.addf %108, %110 : vector<16x128xf32>
    %cst_53 = arith.constant 3.608450e-02 : f32
    %112 = vector.broadcast %cst_53 : f32 to vector<16x128xf32>
    %113 = arith.mulf %112, %96 : vector<16x128xf32>
    %114 = arith.addf %111, %113 : vector<16x128xf32>
    %cst_54 = arith.constant 5.000000e-01 : f32
    %115 = vector.broadcast %cst_54 : f32 to vector<16x128xf32>
    %116 = arith.addf %114, %115 : vector<16x128xf32>
    %cst_55 = arith.constant 0.00887895748 : f32
    %117 = vector.broadcast %cst_55 : f32 to vector<16x128xf32>
    %118 = arith.mulf %117, %90 : vector<16x128xf32>
    %cst_56 = arith.constant 0.0547382608 : f32
    %119 = vector.broadcast %cst_56 : f32 to vector<16x128xf32>
    %120 = arith.mulf %119, %93 : vector<16x128xf32>
    %121 = arith.addf %118, %120 : vector<16x128xf32>
    %cst_57 = arith.constant 0.436382771 : f32
    %122 = vector.broadcast %cst_57 : f32 to vector<16x128xf32>
    %123 = arith.mulf %122, %96 : vector<16x128xf32>
    %124 = arith.addf %121, %123 : vector<16x128xf32>
    %cst_58 = arith.constant 5.000000e-01 : f32
    %125 = vector.broadcast %cst_58 : f32 to vector<16x128xf32>
    %126 = arith.addf %124, %125 : vector<16x128xf32>
    %127 = math.log %106 : vector<16x128xf32>
    %cst_59 = arith.constant 0.333333343 : f32
    %128 = vector.broadcast %cst_59 : f32 to vector<16x128xf32>
    %129 = arith.mulf %127, %128 : vector<16x128xf32>
    %130 = math.exp %129 : vector<16x128xf32>
    %cst_60 = arith.constant 8.856000e-03 : f32
    %131 = vector.broadcast %cst_60 : f32 to vector<16x128xf32>
    %132 = arith.cmpf ogt, %106, %131 : vector<16x128xf32>
    %cst_61 = arith.constant 7.787000e+00 : f32
    %133 = vector.broadcast %cst_61 : f32 to vector<16x128xf32>
    %134 = arith.mulf %133, %106 : vector<16x128xf32>
    %cst_62 = arith.constant 1.379310e-01 : f32
    %135 = vector.broadcast %cst_62 : f32 to vector<16x128xf32>
    %136 = arith.addf %134, %135 : vector<16x128xf32>
    %137 = arith.select %132, %130, %136 : vector<16x128xi1>, vector<16x128xf32>
    %138 = math.log %116 : vector<16x128xf32>
    %cst_63 = arith.constant 0.333333343 : f32
    %139 = vector.broadcast %cst_63 : f32 to vector<16x128xf32>
    %140 = arith.mulf %138, %139 : vector<16x128xf32>
    %141 = math.exp %140 : vector<16x128xf32>
    %cst_64 = arith.constant 8.856000e-03 : f32
    %142 = vector.broadcast %cst_64 : f32 to vector<16x128xf32>
    %143 = arith.cmpf ogt, %116, %142 : vector<16x128xf32>
    %cst_65 = arith.constant 7.787000e+00 : f32
    %144 = vector.broadcast %cst_65 : f32 to vector<16x128xf32>
    %145 = arith.mulf %144, %116 : vector<16x128xf32>
    %cst_66 = arith.constant 1.379310e-01 : f32
    %146 = vector.broadcast %cst_66 : f32 to vector<16x128xf32>
    %147 = arith.addf %145, %146 : vector<16x128xf32>
    %148 = arith.select %143, %141, %147 : vector<16x128xi1>, vector<16x128xf32>
    %149 = math.log %126 : vector<16x128xf32>
    %cst_67 = arith.constant 0.333333343 : f32
    %150 = vector.broadcast %cst_67 : f32 to vector<16x128xf32>
    %151 = arith.mulf %149, %150 : vector<16x128xf32>
    %152 = math.exp %151 : vector<16x128xf32>
    %cst_68 = arith.constant 8.856000e-03 : f32
    %153 = vector.broadcast %cst_68 : f32 to vector<16x128xf32>
    %154 = arith.cmpf ogt, %126, %153 : vector<16x128xf32>
    %cst_69 = arith.constant 7.787000e+00 : f32
    %155 = vector.broadcast %cst_69 : f32 to vector<16x128xf32>
    %156 = arith.mulf %155, %126 : vector<16x128xf32>
    %cst_70 = arith.constant 1.379310e-01 : f32
    %157 = vector.broadcast %cst_70 : f32 to vector<16x128xf32>
    %158 = arith.addf %156, %157 : vector<16x128xf32>
    %159 = arith.select %154, %152, %158 : vector<16x128xi1>, vector<16x128xf32>
    %160 = arith.subf %137, %148 : vector<16x128xf32>
    %161 = arith.mulf %160, %11 : vector<16x128xf32>
    %162 = arith.subf %148, %159 : vector<16x128xf32>
    %163 = arith.mulf %162, %11 : vector<16x128xf32>
    %164 = arith.addf %3, %85 : vector<16x128xf32>
    %165 = arith.addf %3, %87 : vector<16x128xf32>
    %166 = arith.addf %3, %8 : vector<16x128xf32>
    %167 = arith.addf %3, %161 : vector<16x128xf32>
    %168 = arith.addf %3, %163 : vector<16x128xf32>
    %169 = arith.addf %3, %11 : vector<16x128xf32>
    %c1_i32 = arith.constant 1 : i32
    %c0_71 = arith.constant 0 : index
    %c0_72 = arith.constant 0 : index
    %c0_73 = arith.constant 0 : index
    %c0_74 = arith.constant 0 : index
    %170 = vector.load %arg7[%c0_71, %c0_72, %c0_73, %c0_74] : memref<1x1x96x128xf32, #tpu.memory_space<vmem>>, vector<1x1x16x128xf32>
    %171 = vector.shape_cast %170 : vector<1x1x16x128xf32> to vector<16x128xf32>
    %172 = arith.addf %171, %164 : vector<16x128xf32>
    %c0_75 = arith.constant 0 : index
    %c0_76 = arith.constant 0 : index
    %c0_77 = arith.constant 0 : index
    %c0_78 = arith.constant 0 : index
    %173 = vector.load %arg7[%c0_75, %c0_76, %c0_77, %c0_78] : memref<1x1x96x128xf32, #tpu.memory_space<vmem>>, vector<1x1x16x128xf32>
    %174 = vector.shape_cast %173 : vector<1x1x16x128xf32> to vector<16x128xf32>
    %175 = vector.shape_cast %172 : vector<16x128xf32> to vector<1x1x16x128xf32>
    tpu.vector_store %arg7[%c0_75, %c0_76, %c0_77, %c0_78], %175 {strides = array<i32>} : memref<1x1x96x128xf32, #tpu.memory_space<vmem>>, vector<1x1x16x128xf32>,
    %c0_79 = arith.constant 0 : index
    %c0_80 = arith.constant 0 : index
    %c16 = arith.constant 16 : index
    %c0_81 = arith.constant 0 : index
    %176 = vector.load %arg7[%c0_79, %c0_80, %c16, %c0_81] : memref<1x1x96x128xf32, #tpu.memory_space<vmem>>, vector<1x1x16x128xf32>
    %177 = vector.shape_cast %176 : vector<1x1x16x128xf32> to vector<16x128xf32>
    %178 = arith.addf %177, %165 : vector<16x128xf32>
    %c0_82 = arith.constant 0 : index
    %c0_83 = arith.constant 0 : index
    %c16_84 = arith.constant 16 : index
    %c0_85 = arith.constant 0 : index
    %179 = vector.load %arg7[%c0_82, %c0_83, %c16_84, %c0_85] : memref<1x1x96x128xf32, #tpu.memory_space<vmem>>, vector<1x1x16x128xf32>
    %180 = vector.shape_cast %179 : vector<1x1x16x128xf32> to vector<16x128xf32>
    %181 = vector.shape_cast %178 : vector<16x128xf32> to vector<1x1x16x128xf32>
    tpu.vector_store %arg7[%c0_82, %c0_83, %c16_84, %c0_85], %181 {strides = array<i32>} : memref<1x1x96x128xf32, #tpu.memory_space<vmem>>, vector<1x1x16x128xf32>,
    %c0_86 = arith.constant 0 : index
    %c0_87 = arith.constant 0 : index
    %c32 = arith.constant 32 : index
    %c0_88 = arith.constant 0 : index
    %182 = vector.load %arg7[%c0_86, %c0_87, %c32, %c0_88] : memref<1x1x96x128xf32, #tpu.memory_space<vmem>>, vector<1x1x16x128xf32>
    %183 = vector.shape_cast %182 : vector<1x1x16x128xf32> to vector<16x128xf32>
    %184 = arith.addf %183, %166 : vector<16x128xf32>
    %c0_89 = arith.constant 0 : index
    %c0_90 = arith.constant 0 : index
    %c32_91 = arith.constant 32 : index
    %c0_92 = arith.constant 0 : index
    %185 = vector.load %arg7[%c0_89, %c0_90, %c32_91, %c0_92] : memref<1x1x96x128xf32, #tpu.memory_space<vmem>>, vector<1x1x16x128xf32>
    %186 = vector.shape_cast %185 : vector<1x1x16x128xf32> to vector<16x128xf32>
    %187 = vector.shape_cast %184 : vector<16x128xf32> to vector<1x1x16x128xf32>
    tpu.vector_store %arg7[%c0_89, %c0_90, %c32_91, %c0_92], %187 {strides = array<i32>} : memref<1x1x96x128xf32, #tpu.memory_space<vmem>>, vector<1x1x16x128xf32>,
    %c0_93 = arith.constant 0 : index
    %c0_94 = arith.constant 0 : index
    %c48 = arith.constant 48 : index
    %c0_95 = arith.constant 0 : index
    %188 = vector.load %arg7[%c0_93, %c0_94, %c48, %c0_95] : memref<1x1x96x128xf32, #tpu.memory_space<vmem>>, vector<1x1x16x128xf32>
    %189 = vector.shape_cast %188 : vector<1x1x16x128xf32> to vector<16x128xf32>
    %190 = arith.addf %189, %167 : vector<16x128xf32>
    %c0_96 = arith.constant 0 : index
    %c0_97 = arith.constant 0 : index
    %c48_98 = arith.constant 48 : index
    %c0_99 = arith.constant 0 : index
    %191 = vector.load %arg7[%c0_96, %c0_97, %c48_98, %c0_99] : memref<1x1x96x128xf32, #tpu.memory_space<vmem>>, vector<1x1x16x128xf32>
    %192 = vector.shape_cast %191 : vector<1x1x16x128xf32> to vector<16x128xf32>
    %193 = vector.shape_cast %190 : vector<16x128xf32> to vector<1x1x16x128xf32>
    tpu.vector_store %arg7[%c0_96, %c0_97, %c48_98, %c0_99], %193 {strides = array<i32>} : memref<1x1x96x128xf32, #tpu.memory_space<vmem>>, vector<1x1x16x128xf32>,
    %c0_100 = arith.constant 0 : index
    %c0_101 = arith.constant 0 : index
    %c64 = arith.constant 64 : index
    %c0_102 = arith.constant 0 : index
    %194 = vector.load %arg7[%c0_100, %c0_101, %c64, %c0_102] : memref<1x1x96x128xf32, #tpu.memory_space<vmem>>, vector<1x1x16x128xf32>
    %195 = vector.shape_cast %194 : vector<1x1x16x128xf32> to vector<16x128xf32>
    %196 = arith.addf %195, %168 : vector<16x128xf32>
    %c0_103 = arith.constant 0 : index
    %c0_104 = arith.constant 0 : index
    %c64_105 = arith.constant 64 : index
    %c0_106 = arith.constant 0 : index
    %197 = vector.load %arg7[%c0_103, %c0_104, %c64_105, %c0_106] : memref<1x1x96x128xf32, #tpu.memory_space<vmem>>, vector<1x1x16x128xf32>
    %198 = vector.shape_cast %197 : vector<1x1x16x128xf32> to vector<16x128xf32>
    %199 = vector.shape_cast %196 : vector<16x128xf32> to vector<1x1x16x128xf32>
    tpu.vector_store %arg7[%c0_103, %c0_104, %c64_105, %c0_106], %199 {strides = array<i32>} : memref<1x1x96x128xf32, #tpu.memory_space<vmem>>, vector<1x1x16x128xf32>,
    %c0_107 = arith.constant 0 : index
    %c0_108 = arith.constant 0 : index
    %c80 = arith.constant 80 : index
    %c0_109 = arith.constant 0 : index
    %200 = vector.load %arg7[%c0_107, %c0_108, %c80, %c0_109] : memref<1x1x96x128xf32, #tpu.memory_space<vmem>>, vector<1x1x16x128xf32>
    %201 = vector.shape_cast %200 : vector<1x1x16x128xf32> to vector<16x128xf32>
    %202 = arith.addf %201, %169 : vector<16x128xf32>
    %c0_110 = arith.constant 0 : index
    %c0_111 = arith.constant 0 : index
    %c80_112 = arith.constant 80 : index
    %c0_113 = arith.constant 0 : index
    %203 = vector.load %arg7[%c0_110, %c0_111, %c80_112, %c0_113] : memref<1x1x96x128xf32, #tpu.memory_space<vmem>>, vector<1x1x16x128xf32>
    %204 = vector.shape_cast %203 : vector<1x1x16x128xf32> to vector<16x128xf32>
    %205 = vector.shape_cast %202 : vector<16x128xf32> to vector<1x1x16x128xf32>
    tpu.vector_store %arg7[%c0_110, %c0_111, %c80_112, %c0_113], %205 {strides = array<i32>} : memref<1x1x96x128xf32, #tpu.memory_space<vmem>>, vector<1x1x16x128xf32>,
    return
  }
  func.func @transform_0(%arg0: i32, %arg1: i32, %arg2: i32) -> (i32, i32, i32, i32) {
    %c1_i32 = arith.constant 1 : i32
    %0 = arith.muli %arg1, %c1_i32 : i32
    %1 = arith.addi %0, %arg2 : i32
    %c0_i32 = arith.constant 0 : i32
    %c0_i32_0 = arith.constant 0 : i32
    %c0_i32_1 = arith.constant 0 : i32
    return %arg0, %c0_i32, %1, %c0_i32_0 : i32, i32, i32, i32
  }
  func.func @transform_1(%arg0: i32, %arg1: i32, %arg2: i32) -> (i32, i32, i32, i32) {
    %c1_i32 = arith.constant 1 : i32
    %0 = arith.muli %arg1, %c1_i32 : i32
    %1 = arith.addi %0, %arg2 : i32
    %c0_i32 = arith.constant 0 : i32
    %c0_i32_0 = arith.constant 0 : i32
    %c0_i32_1 = arith.constant 0 : i32
    return %arg0, %c0_i32, %1, %c0_i32_0 : i32, i32, i32, i32
  }
  func.func @transform_2(%arg0: i32, %arg1: i32, %arg2: i32) -> (i32, i32, i32, i32) {
    %c1_i32 = arith.constant 1 : i32
    %0 = arith.muli %arg1, %c1_i32 : i32
    %1 = arith.addi %0, %arg2 : i32
    %c0_i32 = arith.constant 0 : i32
    %c0_i32_0 = arith.constant 0 : i32
    %c0_i32_1 = arith.constant 0 : i32
    return %arg0, %c0_i32, %1, %c0_i32_0 : i32, i32, i32, i32
  }
  func.func @transform_3(%arg0: i32, %arg1: i32, %arg2: i32) -> (i32, i32, i32, i32) {
    %c1_i32 = arith.constant 1 : i32
    %0 = arith.muli %arg1, %c1_i32 : i32
    %1 = arith.addi %0, %arg2 : i32
    %c0_i32 = arith.constant 0 : i32
    %c0_i32_0 = arith.constant 0 : i32
    %c0_i32_1 = arith.constant 0 : i32
    return %arg0, %c0_i32, %1, %c0_i32_0 : i32, i32, i32, i32
  }
  func.func @transform_4(%arg0: i32, %arg1: i32, %arg2: i32) -> (i32, i32, i32, i32) {
    %c0_i32 = arith.constant 0 : i32
    %c0_i32_0 = arith.constant 0 : i32
    %c0_i32_1 = arith.constant 0 : i32
    return %arg0, %arg1, %c0_i32, %c0_i32_0 : i32, i32, i32, i32
  }
}

</mosaic_0001>

<llo_original>
// kernel: tpu_custom_call.1
$region0: #{tpu_custom_call.1}
  #allocation0 [shape = 'u32[]', space=smem, size = 0x4, offset = 0x4, fixed_abs, tag = 'smem constant byte address 0x4 - core index']
  #allocation1 [shape = 'u32[144,128]{1,0:T(1,128)}', space=vmem, size = 0x12000, scoped, tag = 'internal scratch']
  %s0 = inlined_call_operand.hbm [shape: f32[2,3,16,128], index: 0, kind: input, shape index: {}]
  %s1 = inlined_call_operand.hbm [shape: f32[2,3,16,128], index: 1, kind: input, shape index: {}]
  %s2 = inlined_call_operand.hbm [shape: f32[2,1,16,128], index: 2, kind: input, shape index: {}]
  %s3 = inlined_call_operand.hbm [shape: f32[2,1,16,128], index: 3, kind: input, shape index: {}]
  %s4 = inlined_call_operand.hbm [shape: f32[2,1,96,128], index: 4, kind: output, shape index: {}]
  %s5 = sld [smem:[#allocation0]]
  $region69: #{tpu_custom_call.1} parent=0
    _
  %s7 = ssub.s32 1, %s5
  %s8 = scalar_select 0, %s7, %s5
  $region1: #{tpu_custom_call.1} parent=0
    #allocation2 [shape = 'u8[49152]{0}', space=vmem, size = 0xc000, scoped, tag = 'input window, operand 0']
    #allocation3 [shape = 's32[2]{0}', space=sflag, size = 0x8, scoped, tag = 'scoped memory for tpu_custom_call.1']
    #allocation4 [shape = 's32[2]{0}', space=sflag, size = 0x8, scoped, tag = 'scoped memory for tpu_custom_call.1']
    #allocation5 [shape = 'u8[49152]{0}', space=vmem, size = 0xc000, scoped, tag = 'input window, operand 1']
    #allocation6 [shape = 's32[2]{0}', space=sflag, size = 0x8, scoped, tag = 'scoped memory for tpu_custom_call.1']
    #allocation7 [shape = 'u8[16384]{0}', space=vmem, size = 0x4000, scoped, tag = 'input window, operand 2']
    #allocation8 [shape = 'u8[16384]{0}', space=vmem, size = 0x4000, scoped, tag = 'input window, operand 3']
    #allocation9 [shape = 's32[2]{0}', space=sflag, size = 0x8, scoped, tag = 'scoped memory for tpu_custom_call.1']
    #allocation10 [shape = 'u8[98304]{0}', space=vmem, size = 0x18000, scoped, tag = 'output window, operand 0']
    %9 = vsyncpa [#allocation3], 0
    %s10 = scalar_lea.sflag [#allocation3], 1
    %11 = vsyncpa %s10, 0
    %12 = vsyncpa [#allocation6], 0
    %s13 = scalar_lea.sflag [#allocation6], 1
    %14 = vsyncpa %s13, 0
    %15 = vsyncpa [#allocation9], 0
    %s16 = scalar_lea.sflag [#allocation9], 1
    %17 = vsyncpa %s16, 0
    %18 = vsyncpa [#allocation4], 0
    %s19 = scalar_lea.sflag [#allocation4], 1
    %20 = vsyncpa %s19, 0
    loop: start=0, step=1, limit=4
    $region2: #{tpu_custom_call.1} parent=1 // loop_pre_header
      _
    $region3: #{tpu_custom_call.1} parent=1 // loop_header
      %s22 = sphi 0, %s26
      %p23 = scmp.ge.s32.totalorder %s22, 4
      %s29 = sphi 0, %s48
      %s30 = sphi 0, %s44
      %s31 = sphi 0, %s40
      %s32 = sphi 0, %s29
      %s33 = sphi 0, %s30
      %s34 = sphi 0, %s31
      %s35 = sphi 0, %s32
      %s36 = sphi 0, %s33
      %s37 = sphi 0, %s34
      %s55 = sphi 0, %s57
      %s58 = sphi 0, %s55
      %s59 = sphi 0, %s58
      %s75 = sphi 0, %s59
      %s85 = sphi 0, %s87
      %s88 = sphi 0, %s85
      %s89 = sphi 0, %s88
      %s105 = sphi 0, %s89
      %s115 = sphi 0, %s117
      %s118 = sphi 0, %s115
      %s119 = sphi 0, %s118
      %s135 = sphi 0, %s119
      %s145 = sphi 0, %s147
      %s148 = sphi 0, %s145
      %s149 = sphi 0, %s148
      %s165 = sphi 0, %s149
      %s173 = sphi 0, %s175
      %s176 = sphi 0, %s173
      %s177 = sphi 0, %s176
      %s193 = sphi 0, %s177
    $region4: #{tpu_custom_call.1} parent=1 // loop_header_branch
      %25 = sbr.rel (%p23) target = $region8
    $region5: #{tpu_custom_call.1} parent=1 // loop_body
      %s27 = ssub.s32 %s22, 1
      %s28 = ssub.s32 %s22, 2
      %s38 = sadd.s32 1, %s31
      %p39 = scmp.ge.s32.totalorder %s38, 1
      %s40 = scalar_select %p39, 0, %s38
      %s41 = sadd.s32 1, %s30
      %s42 = scalar_select %p39, %s41, %s30
      %p43 = scmp.ge.s32.totalorder %s42, 1
      %s44 = scalar_select %p43, 0, %s42
      %s45 = sadd.s32 1, %s29
      %s46 = scalar_select %p43, %s45, %s29
      %p47 = scmp.ge.s32.totalorder %s46, 2
      %s48 = scalar_select %p47, 0, %s46
      %s49 = sadd.s32 %s30, %s31
      %s50 = sadd.s32 %s44, %s40
      %s51 = ssub.s32 %s29, %s48
      %s52 = ssub.s32 %s49, %s50
      %s53 = sor.u32 %s51, %s52
      %p54 = scmp.eq.s32.totalorder %s53, 0
      %s56 = sadd.s32 %s55, 1
      %s57 = scalar_select %p54, %s55, %s56
      %p60 = pneg %p54
      %p61 = scmp.eq.s32.totalorder %s22, 1
      %p62 = por %p60, %p61
      %p63 = scmp.ne.s32.totalorder %s55, %s58
      %p64 = scmp.eq.s32.totalorder %s22, 0
      %p65 = por %p63, %p64
      %p66 = scmp.ne.s32.totalorder %s55, %s58
      %p67 = scmp.eq.s32.totalorder %s27, 1
      %p68 = por %p66, %p67
      %p69 = scmp.ne.s32.totalorder %s58, %s59
      %p70 = scmp.eq.s32.totalorder %s27, 0
      %p71 = por %p69, %p70
      %p72 = scmp.ne.s32.totalorder %s58, %s59
      %p73 = scmp.eq.s32.totalorder %s28, 1
      %p74 = por %p72, %p73
      %p76 = scmp.ne.s32.totalorder %s59, %s75
      %p77 = scmp.eq.s32.totalorder %s28, 0
      %p78 = por %p76, %p77
      %s79 = sadd.s32 %s30, %s31
      %s80 = sadd.s32 %s44, %s40
      %s81 = ssub.s32 %s29, %s48
      %s82 = ssub.s32 %s79, %s80
      %s83 = sor.u32 %s81, %s82
      %p84 = scmp.eq.s32.totalorder %s83, 0
      %s86 = sadd.s32 %s85, 1
      %s87 = scalar_select %p84, %s85, %s86
      %p90 = pneg %p84
      %p91 = scmp.eq.s32.totalorder %s22, 1
      %p92 = por %p90, %p91
      %p93 = scmp.ne.s32.totalorder %s85, %s88
      %p94 = scmp.eq.s32.totalorder %s22, 0
      %p95 = por %p93, %p94
      %p96 = scmp.ne.s32.totalorder %s85, %s88
      %p97 = scmp.eq.s32.totalorder %s27, 1
      %p98 = por %p96, %p97
      %p99 = scmp.ne.s32.totalorder %s88, %s89
      %p100 = scmp.eq.s32.totalorder %s27, 0
      %p101 = por %p99, %p100
      %p102 = scmp.ne.s32.totalorder %s88, %s89
      %p103 = scmp.eq.s32.totalorder %s28, 1
      %p104 = por %p102, %p103
      %p106 = scmp.ne.s32.totalorder %s89, %s105
      %p107 = scmp.eq.s32.totalorder %s28, 0
      %p108 = por %p106, %p107
      %s109 = sadd.s32 %s30, %s31
      %s110 = sadd.s32 %s44, %s40
      %s111 = ssub.s32 %s29, %s48
      %s112 = ssub.s32 %s109, %s110
      %s113 = sor.u32 %s111, %s112
      %p114 = scmp.eq.s32.totalorder %s113, 0
      %s116 = sadd.s32 %s115, 1
      %s117 = scalar_select %p114, %s115, %s116
      %p120 = pneg %p114
      %p121 = scmp.eq.s32.totalorder %s22, 1
      %p122 = por %p120, %p121
      %p123 = scmp.ne.s32.totalorder %s115, %s118
      %p124 = scmp.eq.s32.totalorder %s22, 0
      %p125 = por %p123, %p124
      %p126 = scmp.ne.s32.totalorder %s115, %s118
      %p127 = scmp.eq.s32.totalorder %s27, 1
      %p128 = por %p126, %p127
      %p129 = scmp.ne.s32.totalorder %s118, %s119
      %p130 = scmp.eq.s32.totalorder %s27, 0
      %p131 = por %p129, %p130
      %p132 = scmp.ne.s32.totalorder %s118, %s119
      %p133 = scmp.eq.s32.totalorder %s28, 1
      %p134 = por %p132, %p133
      %p136 = scmp.ne.s32.totalorder %s119, %s135
      %p137 = scmp.eq.s32.totalorder %s28, 0
      %p138 = por %p136, %p137
      %s139 = sadd.s32 %s30, %s31
      %s140 = sadd.s32 %s44, %s40
      %s141 = ssub.s32 %s29, %s48
      %s142 = ssub.s32 %s139, %s140
      %s143 = sor.u32 %s141, %s142
      %p144 = scmp.eq.s32.totalorder %s143, 0
      %s146 = sadd.s32 %s145, 1
      %s147 = scalar_select %p144, %s145, %s146
      %p150 = pneg %p144
      %p151 = scmp.eq.s32.totalorder %s22, 1
      %p152 = por %p150, %p151
      %p153 = scmp.ne.s32.totalorder %s145, %s148
      %p154 = scmp.eq.s32.totalorder %s22, 0
      %p155 = por %p153, %p154
      %p156 = scmp.ne.s32.totalorder %s145, %s148
      %p157 = scmp.eq.s32.totalorder %s27, 1
      %p158 = por %p156, %p157
      %p159 = scmp.ne.s32.totalorder %s148, %s149
      %p160 = scmp.eq.s32.totalorder %s27, 0
      %p161 = por %p159, %p160
      %p162 = scmp.ne.s32.totalorder %s148, %s149
      %p163 = scmp.eq.s32.totalorder %s28, 1
      %p164 = por %p162, %p163
      %p166 = scmp.ne.s32.totalorder %s149, %s165
      %p167 = scmp.eq.s32.totalorder %s28, 0
      %p168 = por %p166, %p167
      %s169 = ssub.s32 %s29, %s48
      %s170 = ssub.s32 %s30, %s44
      %s171 = sor.u32 %s169, %s170
      %p172 = scmp.eq.s32.totalorder %s171, 0
      %s174 = sadd.s32 %s173, 1
      %s175 = scalar_select %p172, %s173, %s174
      %p178 = pneg %p172
      %p179 = scmp.eq.s32.totalorder %s22, 1
      %p180 = por %p178, %p179
      %p181 = scmp.ne.s32.totalorder %s173, %s176
      %p182 = scmp.eq.s32.totalorder %s22, 0
      %p183 = por %p181, %p182
      %p184 = scmp.ne.s32.totalorder %s173, %s176
      %p185 = scmp.eq.s32.totalorder %s27, 1
      %p186 = por %p184, %p185
      %p187 = scmp.ne.s32.totalorder %s176, %s177
      %p188 = scmp.eq.s32.totalorder %s27, 0
      %p189 = por %p187, %p188
      %p190 = scmp.ne.s32.totalorder %s176, %s177
      %p191 = scmp.eq.s32.totalorder %s28, 1
      %p192 = por %p190, %p191
      %p194 = scmp.ne.s32.totalorder %s177, %s193
      %p195 = scmp.eq.s32.totalorder %s28, 0
      %p196 = por %p194, %p195
      %p197 = scmp.le.s32.totalorder 1, %s22
      %p198 = scmp.lt.s32.totalorder %s22, 3
      %p199 = pnand %p197, %p198
      %p200 = pneg %p199
      // Predicated region
      $region9: #{tpu_custom_call.1} parent=5 // pred_check
        _
      $region10: #{tpu_custom_call.1} parent=5 // pred_check_branch
        %202 = sbr.rel (%p199) target = $region12
      $region11: #{tpu_custom_call.1} parent=5 // pred_region
        %s203 = ssub.s32 %s22, 1
      $region12: #{tpu_custom_call.1} parent=5 // pred_fallthru
        _
      %p204 = scmp.lt.s32.totalorder %s22, 2
      // Predicated region
      $region13: #{tpu_custom_call.1} parent=5 // pred_check
        %p205 = pneg %p204
      $region14: #{tpu_custom_call.1} parent=5 // pred_check_branch
        %207 = sbr.rel (%p205) target = $region16
      $region15: #{tpu_custom_call.1} parent=5 // pred_region
        // Predicated region
        $region17: #{tpu_custom_call.1} parent=15 // pred_check
          %p208 = pneg %p65
        $region18: #{tpu_custom_call.1} parent=15 // pred_check_branch
          %210 = sbr.rel (%p208) target = $region20
        $region19: #{tpu_custom_call.1} parent=15 // pred_region
          %s211 = sand.u32 %s55, 1
          %s212 = scalar_lea.sflag [#allocation3], %s211
          %s213 = sand.u32 %s55, 1
          %s214 = smul.addr %s213, 48
          %s215 = scalar_lea.vmem [#allocation2], %s214
          %s216 = sadd.s32 %s30, %s31
          %s217 = smul.u32 2, %s216
          %s219 = ssub.s32 768, 768
          %220 = vsyncadd %s212, %s219
          %s221 = smul.addr %s29, 6
          %s222 = sadd.s32 %s217, %s221
          %s223 = smul.addr %s222, 128
          %s224 = scalar_lea.hbm %s0, %s223
          %s225 = sshll.u32 %s215, 4
          %s226 = int_to_ptr.vmem [resolvable:$true] %s225
          %231 = dma.hbm_to_vmem [thread:$0]  %s224, 768, %s226, %s212, 128, 128, 8
        $region20: #{tpu_custom_call.1} parent=15 // pred_fallthru
          _
        // Predicated region
        $region21: #{tpu_custom_call.1} parent=15 // pred_check
          %p232 = pneg %p95
        $region22: #{tpu_custom_call.1} parent=15 // pred_check_branch
          %234 = sbr.rel (%p232) target = $region24
        $region23: #{tpu_custom_call.1} parent=15 // pred_region
          %s235 = sand.u32 %s22, 1
          %s236 = scalar_lea.sflag [#allocation6], %s235
          %s237 = sand.u32 %s85, 1
          %s238 = smul.addr %s237, 48
          %s239 = scalar_lea.vmem [#allocation5], %s238
          %s240 = sadd.s32 %s30, %s31
          %s241 = smul.u32 2, %s240
          %s243 = ssub.s32 768, 768
          %244 = vsyncadd %s236, %s243
          %s245 = smul.addr %s29, 6
          %s246 = sadd.s32 %s241, %s245
          %s247 = smul.addr %s246, 128
          %s248 = scalar_lea.hbm %s1, %s247
          %s249 = sshll.u32 %s239, 4
          %s250 = int_to_ptr.vmem [resolvable:$true] %s249
          %255 = dma.hbm_to_vmem [thread:$0]  %s248, 768, %s250, %s236, 128, 128, 8
        $region24: #{tpu_custom_call.1} parent=15 // pred_fallthru
          _
        // Predicated region
        $region25: #{tpu_custom_call.1} parent=15 // pred_check
          %p256 = pneg %p125
        $region26: #{tpu_custom_call.1} parent=15 // pred_check_branch
          %258 = sbr.rel (%p256) target = $region28
        $region27: #{tpu_custom_call.1} parent=15 // pred_region
          %s259 = sand.u32 %s22, 1
          %s260 = scalar_lea.sflag [#allocation6], %s259
          %s261 = sand.u32 %s115, 1
          %s262 = smul.addr %s261, 16
          %s263 = scalar_lea.vmem [#allocation7], %s262
          %s264 = sadd.s32 %s30, %s31
          %s265 = smul.u32 2, %s264
          %s267 = ssub.s32 256, 256
          %268 = vsyncadd %s260, %s267
          %s269 = smul.addr %s29, 2
          %s270 = sadd.s32 %s265, %s269
          %s271 = smul.addr %s270, 128
          %s272 = scalar_lea.hbm %s2, %s271
          %s273 = sshll.u32 %s263, 4
          %s274 = int_to_ptr.vmem [resolvable:$true] %s273
          %279 = dma.hbm_to_vmem [thread:$0]  %s272, 256, %s274, %s260, 128, 128, 8
        $region28: #{tpu_custom_call.1} parent=15 // pred_fallthru
          _
        // Predicated region
        $region29: #{tpu_custom_call.1} parent=15 // pred_check
          %p280 = pneg %p155
        $region30: #{tpu_custom_call.1} parent=15 // pred_check_branch
          %282 = sbr.rel (%p280) target = $region32
        $region31: #{tpu_custom_call.1} parent=15 // pred_region
          %s283 = sand.u32 %s145, 1
          %s284 = scalar_lea.sflag [#allocation9], %s283
          %s285 = sand.u32 %s145, 1
          %s286 = smul.addr %s285, 16
          %s287 = scalar_lea.vmem [#allocation8], %s286
          %s288 = sadd.s32 %s30, %s31
          %s289 = smul.u32 2, %s288
          %s291 = ssub.s32 256, 256
          %292 = vsyncadd %s284, %s291
          %s293 = smul.addr %s29, 2
          %s294 = sadd.s32 %s289, %s293
          %s295 = smul.addr %s294, 128
          %s296 = scalar_lea.hbm %s3, %s295
          %s297 = sshll.u32 %s287, 4
          %s298 = int_to_ptr.vmem [resolvable:$true] %s297
          %303 = dma.hbm_to_vmem [thread:$0]  %s296, 256, %s298, %s284, 128, 128, 8
        $region32: #{tpu_custom_call.1} parent=15 // pred_fallthru
          _
      $region16: #{tpu_custom_call.1} parent=5 // pred_fallthru
        _
      %p304 = scmp.le.s32.totalorder 1, %s22
      %p305 = scmp.lt.s32.totalorder %s22, 3
      %p306 = pnand %p304, %p305
      %p307 = pneg %p306
      // Predicated region
      $region33: #{tpu_custom_call.1} parent=5 // pred_check
        _
      $region34: #{tpu_custom_call.1} parent=5 // pred_check_branch
        %309 = sbr.rel (%p306) target = $region36
      $region35: #{tpu_custom_call.1} parent=5 // pred_region
        %s310 = ssub.s32 %s22, 1
        %s311 = sand.u32 %s58, 1
        %s312 = scalar_lea.sflag [#allocation3], %s311
        %s313 = sand.u32 %s58, 1
        %s314 = smul.addr %s313, 48
        %s315 = scalar_lea.vmem [#allocation2], %s314
        // Predicated region
        $region37: #{tpu_custom_call.1} parent=35 // pred_check
          %p316 = pneg %p71
        $region38: #{tpu_custom_call.1} parent=35 // pred_check_branch
          %318 = sbr.rel (%p316) target = $region40
        $region39: #{tpu_custom_call.1} parent=35 // pred_region
          %319 = dma.done %s312, 768
        $region40: #{tpu_custom_call.1} parent=35 // pred_fallthru
          _
        %s320 = sand.u32 %s27, 1
        %s321 = scalar_lea.sflag [#allocation6], %s320
        %s322 = sand.u32 %s88, 1
        %s323 = smul.addr %s322, 48
        %s324 = scalar_lea.vmem [#allocation5], %s323
        // Predicated region
        $region41: #{tpu_custom_call.1} parent=35 // pred_check
          %p325 = pneg %p101
        $region42: #{tpu_custom_call.1} parent=35 // pred_check_branch
          %327 = sbr.rel (%p325) target = $region44
        $region43: #{tpu_custom_call.1} parent=35 // pred_region
          %328 = dma.done %s321, 768
        $region44: #{tpu_custom_call.1} parent=35 // pred_fallthru
          _
        %s329 = sand.u32 %s27, 1
        %s330 = scalar_lea.sflag [#allocation6], %s329
        %s331 = sand.u32 %s118, 1
        %s332 = smul.addr %s331, 16
        %s333 = scalar_lea.vmem [#allocation7], %s332
        // Predicated region
        $region45: #{tpu_custom_call.1} parent=35 // pred_check
          %p334 = pneg %p131
        $region46: #{tpu_custom_call.1} parent=35 // pred_check_branch
          %336 = sbr.rel (%p334) target = $region48
        $region47: #{tpu_custom_call.1} parent=35 // pred_region
          %337 = dma.done %s330, 256
        $region48: #{tpu_custom_call.1} parent=35 // pred_fallthru
          _
        %s338 = sand.u32 %s148, 1
        %s339 = scalar_lea.sflag [#allocation9], %s338
        %s340 = sand.u32 %s148, 1
        %s341 = smul.addr %s340, 16
        %s342 = scalar_lea.vmem [#allocation8], %s341
        // Predicated region
        $region49: #{tpu_custom_call.1} parent=35 // pred_check
          %p343 = pneg %p161
        $region50: #{tpu_custom_call.1} parent=35 // pred_check_branch
          %345 = sbr.rel (%p343) target = $region52
        $region51: #{tpu_custom_call.1} parent=35 // pred_region
          %346 = dma.done %s339, 256
        $region52: #{tpu_custom_call.1} parent=35 // pred_fallthru
          _
        %s347 = sand.u32 %s58, 1
        %s348 = scalar_lea.sflag [#allocation3], %s347
        %s349 = sand.u32 %s58, 1
        %s350 = smul.addr %s349, 48
        %s351 = scalar_lea.vmem [#allocation2], %s350
        %p352 = pneg %p71
        %p353 = pneg %p68
        %s354 = sand.u32 %s27, 1
        %s355 = scalar_lea.sflag [#allocation6], %s354
        %s356 = sand.u32 %s88, 1
        %s357 = smul.addr %s356, 48
        %s358 = scalar_lea.vmem [#allocation5], %s357
        %p359 = pneg %p101
        %p360 = pneg %p98
        %s361 = sand.u32 %s27, 1
        %s362 = scalar_lea.sflag [#allocation6], %s361
        %s363 = sand.u32 %s118, 1
        %s364 = smul.addr %s363, 16
        %s365 = scalar_lea.vmem [#allocation7], %s364
        %p366 = pneg %p131
        %p367 = pneg %p128
        %s368 = sand.u32 %s148, 1
        %s369 = scalar_lea.sflag [#allocation9], %s368
        %s370 = sand.u32 %s148, 1
        %s371 = smul.addr %s370, 16
        %s372 = scalar_lea.vmem [#allocation8], %s371
        %p373 = pneg %p161
        %p374 = pneg %p158
        %p375 = pneg %p189
        %p376 = pneg %p186
        %s377 = sand.u32 %s176, 1
        %s378 = scalar_lea.sflag [#allocation4], %s377
        %s379 = sand.u32 %s176, 1
        %s380 = smul.addr %s379, 96
        %s381 = scalar_lea.vmem [#allocation10], %s380
        %s382 = sadd.s32 %s33, %s34
        %s383 = smul.u32 2, %s382
        %s384 = sadd.s32 %s33, %s34
        %s385 = smul.u32 2, %s384
        %s386 = sadd.s32 %s33, %s34
        %s387 = smul.u32 2, %s386
        %s388 = sadd.s32 %s33, %s34
        %s389 = smul.u32 2, %s388
        %p390 = scmp.eq.s32.totalorder %s34, 0
        // Predicated region
        $region53: #{tpu_custom_call.1} parent=35 // pred_check
          %p391 = pneg %p390
        $region54: #{tpu_custom_call.1} parent=35 // pred_check_branch
          %393 = sbr.rel (%p391) target = $region56
        $region55: #{tpu_custom_call.1} parent=35 // pred_region
          %394 = vst [vmem:[%s381] sm:$0xff] 0.0
          %395 = vst [vmem:[%s381 + $0x8] sm:$0xff] 0.0
          %396 = vst [vmem:[%s381 + $0x10] sm:$0xff] 0.0
          %397 = vst [vmem:[%s381 + $0x18] sm:$0xff] 0.0
          %398 = vst [vmem:[%s381 + $0x20] sm:$0xff] 0.0
          %399 = vst [vmem:[%s381 + $0x28] sm:$0xff] 0.0
          %400 = vst [vmem:[%s381 + $0x30] sm:$0xff] 0.0
          %401 = vst [vmem:[%s381 + $0x38] sm:$0xff] 0.0
          %402 = vst [vmem:[%s381 + $0x40] sm:$0xff] 0.0
          %403 = vst [vmem:[%s381 + $0x48] sm:$0xff] 0.0
          %404 = vst [vmem:[%s381 + $0x50] sm:$0xff] 0.0
          %405 = vst [vmem:[%s381 + $0x58] sm:$0xff] 0.0
        $region56: #{tpu_custom_call.1} parent=35 // pred_fallthru
          _
        %v406 = vld [vmem:[%s333] sm:$0xff]
        %v407 = vld [vmem:[%s333 + $0x8] sm:$0xff]
        %v408 = vld [vmem:[%s342] sm:$0xff]
        %v409 = vld [vmem:[%s342 + $0x8] sm:$0xff]
        %v410 = vld [vmem:[%s315] sm:$0xff]
        %v411 = vld [vmem:[%s315 + $0x8] sm:$0xff]
        %s412 = sadd.s32 0, 16
        %s413 = scalar_lea.vmem %s315, %s412 [#allocation2]
        %v414 = vld [vmem:[%s413] sm:$0xff]
        %v415 = vld [vmem:[%s413 + $0x8] sm:$0xff]
        %s416 = sadd.s32 0, 32
        %s417 = scalar_lea.vmem %s315, %s416 [#allocation2]
        %v418 = vld [vmem:[%s417] sm:$0xff]
        %v419 = vld [vmem:[%s417 + $0x8] sm:$0xff]
        %v420 = vmul.f32 %v410, 0.21697637
        %v421 = vmul.f32 %v411, 0.21697637
        %v422 = vmul.f32 %v414, 0.18810971
        %v423 = vmul.f32 %v415, 0.18810971
        %v424 = vadd.f32 %v420, %v422
        %v425 = vadd.f32 %v421, %v423
        %v426 = vmul.f32 %v418, 0.094913915
        %v427 = vmul.f32 %v419, 0.094913915
        %v428 = vadd.f32 %v424, %v426
        %v429 = vadd.f32 %v425, %v427
        %v430 = vadd.f32 %v428, 0.5
        %v431 = vadd.f32 %v429, 0.5
        %v432 = vmul.f32 %v410, 0.1063355
        %v433 = vmul.f32 %v411, 0.1063355
        %v434 = vmul.f32 %v414, 0.35758
        %v435 = vmul.f32 %v415, 0.35758
        %v436 = vadd.f32 %v432, %v434
        %v437 = vadd.f32 %v433, %v435
        %v438 = vmul.f32 %v418, 0.0360845
        %v439 = vmul.f32 %v419, 0.0360845
        %v440 = vadd.f32 %v436, %v438
        %v441 = vadd.f32 %v437, %v439
        %v442 = vadd.f32 %v440, 0.5
        %v443 = vadd.f32 %v441, 0.5
        %v444 = vmul.f32 %v410, 0.0088789575
        %v445 = vmul.f32 %v411, 0.0088789575
        %v446 = vmul.f32 %v414, 0.05473826
        %v447 = vmul.f32 %v415, 0.05473826
        %v448 = vadd.f32 %v444, %v446
        %v449 = vadd.f32 %v445, %v447
        %v450 = vmul.f32 %v418, 0.43638277
        %v451 = vmul.f32 %v419, 0.43638277
        %v452 = vadd.f32 %v448, %v450
        %v453 = vadd.f32 %v449, %v451
        %v454 = vadd.f32 %v452, 0.5
        %v455 = vadd.f32 %v453, 0.5
        %v456 = vlog2.pop %v430
        %v457 = vmul.f32 %v456, 0.6931472
        %v458 = vlog2.pop %v431
        %v459 = vmul.f32 %v458, 0.6931472
        %v460 = vmul.f32 %v457, 0.33333334
        %v461 = vmul.f32 %v459, 0.33333334
        %v462 = vmul.f32 %v460, 1.442695
        %v463 = vpow.pop %v462
        %v464 = vmul.f32 %v461, 1.442695
        %v465 = vpow.pop %v464
        %vm466 = vcmp.gt.f32.partialorder %v430, 0.008856
        %vm467 = vcmp.gt.f32.partialorder %v431, 0.008856
        %v468 = vmul.f32 %v430, 7.787
        %v469 = vmul.f32 %v431, 7.787
        %v470 = vadd.f32 %v468, 0.137931
        %v471 = vadd.f32 %v469, 0.137931
        %v472 = vsel %vm466, %v463, %v470
        %v473 = vsel %vm467, %v465, %v471
        %v474 = vlog2.pop %v442
        %v475 = vmul.f32 %v474, 0.6931472
        %v476 = vlog2.pop %v443
        %v477 = vmul.f32 %v476, 0.6931472
        %v478 = vmul.f32 %v475, 0.33333334
        %v479 = vmul.f32 %v477, 0.33333334
        %v480 = vmul.f32 %v478, 1.442695
        %v481 = vpow.pop %v480
        %v482 = vmul.f32 %v479, 1.442695
        %v483 = vpow.pop %v482
        %vm484 = vcmp.gt.f32.partialorder %v442, 0.008856
        %vm485 = vcmp.gt.f32.partialorder %v443, 0.008856
        %v486 = vmul.f32 %v442, 7.787
        %v487 = vmul.f32 %v443, 7.787
        %v488 = vadd.f32 %v486, 0.137931
        %v489 = vadd.f32 %v487, 0.137931
        %v490 = vsel %vm484, %v481, %v488
        %v491 = vsel %vm485, %v483, %v489
        %v492 = vlog2.pop %v454
        %v493 = vmul.f32 %v492, 0.6931472
        %v494 = vlog2.pop %v455
        %v495 = vmul.f32 %v494, 0.6931472
        %v496 = vmul.f32 %v493, 0.33333334
        %v497 = vmul.f32 %v495, 0.33333334
        %v498 = vmul.f32 %v496, 1.442695
        %v499 = vpow.pop %v498
        %v500 = vmul.f32 %v497, 1.442695
        %v501 = vpow.pop %v500
        %vm502 = vcmp.gt.f32.partialorder %v454, 0.008856
        %vm503 = vcmp.gt.f32.partialorder %v455, 0.008856
        %v504 = vmul.f32 %v454, 7.787
        %v505 = vmul.f32 %v455, 7.787
        %v506 = vadd.f32 %v504, 0.137931
        %v507 = vadd.f32 %v505, 0.137931
        %v508 = vsel %vm502, %v499, %v506
        %v509 = vsel %vm503, %v501, %v507
        %v510 = vsub.f32 %v472, %v490
        %v511 = vsub.f32 %v473, %v491
        %v512 = vmul.f32 %v510, %v406
        %v513 = vmul.f32 %v511, %v407
        %v514 = vsub.f32 %v490, %v508
        %v515 = vsub.f32 %v491, %v509
        %v516 = vmul.f32 %v514, %v406
        %v517 = vmul.f32 %v515, %v407
        %v518 = vld [vmem:[%s324] sm:$0xff]
        %v519 = vld [vmem:[%s324 + $0x8] sm:$0xff]
        %s520 = scalar_lea.vmem %s324, %s412 [#allocation5]
        %v521 = vld [vmem:[%s520] sm:$0xff]
        %v522 = vld [vmem:[%s520 + $0x8] sm:$0xff]
        %s523 = scalar_lea.vmem %s324, %s416 [#allocation5]
        %v524 = vld [vmem:[%s523] sm:$0xff]
        %v525 = vld [vmem:[%s523 + $0x8] sm:$0xff]
        %v526 = vmul.f32 %v518, 0.21697637
        %v527 = vmul.f32 %v519, 0.21697637
        %v528 = vmul.f32 %v521, 0.18810971
        %v529 = vmul.f32 %v522, 0.18810971
        %v530 = vadd.f32 %v526, %v528
        %v531 = vadd.f32 %v527, %v529
        %v532 = vmul.f32 %v524, 0.094913915
        %v533 = vmul.f32 %v525, 0.094913915
        %v534 = vadd.f32 %v530, %v532
        %v535 = vadd.f32 %v531, %v533
        %v536 = vadd.f32 %v534, 0.5
        %v537 = vadd.f32 %v535, 0.5
        %v538 = vmul.f32 %v518, 0.1063355
        %v539 = vmul.f32 %v519, 0.1063355
        %v540 = vmul.f32 %v521, 0.35758
        %v541 = vmul.f32 %v522, 0.35758
        %v542 = vadd.f32 %v538, %v540
        %v543 = vadd.f32 %v539, %v541
        %v544 = vmul.f32 %v524, 0.0360845
        %v545 = vmul.f32 %v525, 0.0360845
        %v546 = vadd.f32 %v542, %v544
        %v547 = vadd.f32 %v543, %v545
        %v548 = vadd.f32 %v546, 0.5
        %v549 = vadd.f32 %v547, 0.5
        %v550 = vmul.f32 %v518, 0.0088789575
        %v551 = vmul.f32 %v519, 0.0088789575
        %v552 = vmul.f32 %v521, 0.05473826
        %v553 = vmul.f32 %v522, 0.05473826
        %v554 = vadd.f32 %v550, %v552
        %v555 = vadd.f32 %v551, %v553
        %v556 = vmul.f32 %v524, 0.43638277
        %v557 = vmul.f32 %v525, 0.43638277
        %v558 = vadd.f32 %v554, %v556
        %v559 = vadd.f32 %v555, %v557
        %v560 = vadd.f32 %v558, 0.5
        %v561 = vadd.f32 %v559, 0.5
        %v562 = vlog2.pop %v536
        %v563 = vmul.f32 %v562, 0.6931472
        %v564 = vlog2.pop %v537
        %v565 = vmul.f32 %v564, 0.6931472
        %v566 = vmul.f32 %v563, 0.33333334
        %v567 = vmul.f32 %v565, 0.33333334
        %v568 = vmul.f32 %v566, 1.442695
        %v569 = vpow.pop %v568
        %v570 = vmul.f32 %v567, 1.442695
        %v571 = vpow.pop %v570
        %vm572 = vcmp.gt.f32.partialorder %v536, 0.008856
        %vm573 = vcmp.gt.f32.partialorder %v537, 0.008856
        %v574 = vmul.f32 %v536, 7.787
        %v575 = vmul.f32 %v537, 7.787
        %v576 = vadd.f32 %v574, 0.137931
        %v577 = vadd.f32 %v575, 0.137931
        %v578 = vsel %vm572, %v569, %v576
        %v579 = vsel %vm573, %v571, %v577
        %v580 = vlog2.pop %v548
        %v581 = vmul.f32 %v580, 0.6931472
        %v582 = vlog2.pop %v549
        %v583 = vmul.f32 %v582, 0.6931472
        %v584 = vmul.f32 %v581, 0.33333334
        %v585 = vmul.f32 %v583, 0.33333334
        %v586 = vmul.f32 %v584, 1.442695
        %v587 = vpow.pop %v586
        %v588 = vmul.f32 %v585, 1.442695
        %v589 = vpow.pop %v588
        %vm590 = vcmp.gt.f32.partialorder %v548, 0.008856
        %vm591 = vcmp.gt.f32.partialorder %v549, 0.008856
        %v592 = vmul.f32 %v548, 7.787
        %v593 = vmul.f32 %v549, 7.787
        %v594 = vadd.f32 %v592, 0.137931
        %v595 = vadd.f32 %v593, 0.137931
        %v596 = vsel %vm590, %v587, %v594
        %v597 = vsel %vm591, %v589, %v595
        %v598 = vlog2.pop %v560
        %v599 = vmul.f32 %v598, 0.6931472
        %v600 = vlog2.pop %v561
        %v601 = vmul.f32 %v600, 0.6931472
        %v602 = vmul.f32 %v599, 0.33333334
        %v603 = vmul.f32 %v601, 0.33333334
        %v604 = vmul.f32 %v602, 1.442695
        %v605 = vpow.pop %v604
        %v606 = vmul.f32 %v603, 1.442695
        %v607 = vpow.pop %v606
        %vm608 = vcmp.gt.f32.partialorder %v560, 0.008856
        %vm609 = vcmp.gt.f32.partialorder %v561, 0.008856
        %v610 = vmul.f32 %v560, 7.787
        %v611 = vmul.f32 %v561, 7.787
        %v612 = vadd.f32 %v610, 0.137931
        %v613 = vadd.f32 %v611, 0.137931
        %v614 = vsel %vm608, %v605, %v612
        %v615 = vsel %vm609, %v607, %v613
        %v616 = vsub.f32 %v578, %v596
        %v617 = vsub.f32 %v579, %v597
        %v618 = vmul.f32 %v616, %v408
        %v619 = vmul.f32 %v617, %v409
        %v620 = vsub.f32 %v596, %v614
        %v621 = vsub.f32 %v597, %v615
        %v622 = vmul.f32 %v620, %v408
        %v623 = vmul.f32 %v621, %v409
        %v624 = vadd.f32 %v512, 0.0
        %v625 = vadd.f32 %v513, 0.0
        %v626 = vadd.f32 %v516, 0.0
        %v627 = vadd.f32 %v517, 0.0
        %v628 = vadd.f32 %v406, 0.0
        %v629 = vadd.f32 %v407, 0.0
        %v630 = vadd.f32 %v618, 0.0
        %v631 = vadd.f32 %v619, 0.0
        %v632 = vadd.f32 %v622, 0.0
        %v633 = vadd.f32 %v623, 0.0
        %v634 = vadd.f32 %v408, 0.0
        %v635 = vadd.f32 %v409, 0.0
        %v636 = vld [vmem:[%s381] sm:$0xff]
        %v637 = vld [vmem:[%s381 + $0x8] sm:$0xff]
        %v638 = vadd.f32 %v636, %v624
        %v639 = vadd.f32 %v637, %v625
        %640 = vst [vmem:[%s381] sm:$0xff] %v638
        %641 = vst [vmem:[%s381 + $0x8] sm:$0xff] %v639
        %v642 = vld [vmem:[%s381 + $0x10] sm:$0xff]
        %v643 = vld [vmem:[%s381 + $0x18] sm:$0xff]
        %v644 = vadd.f32 %v642, %v626
        %v645 = vadd.f32 %v643, %v627
        %646 = vst [vmem:[%s381 + $0x10] sm:$0xff] %v644
        %647 = vst [vmem:[%s381 + $0x18] sm:$0xff] %v645
        %v648 = vld [vmem:[%s381 + $0x20] sm:$0xff]
        %v649 = vld [vmem:[%s381 + $0x28] sm:$0xff]
        %v650 = vadd.f32 %v648, %v628
        %v651 = vadd.f32 %v649, %v629
        %652 = vst [vmem:[%s381 + $0x20] sm:$0xff] %v650
        %653 = vst [vmem:[%s381 + $0x28] sm:$0xff] %v651
        %v654 = vld [vmem:[%s381 + $0x30] sm:$0xff]
        %v655 = vld [vmem:[%s381 + $0x38] sm:$0xff]
        %v656 = vadd.f32 %v654, %v630
        %v657 = vadd.f32 %v655, %v631
        %658 = vst [vmem:[%s381 + $0x30] sm:$0xff] %v656
        %659 = vst [vmem:[%s381 + $0x38] sm:$0xff] %v657
        %v660 = vld [vmem:[%s381 + $0x40] sm:$0xff]
        %v661 = vld [vmem:[%s381 + $0x48] sm:$0xff]
        %v662 = vadd.f32 %v660, %v632
        %v663 = vadd.f32 %v661, %v633
        %664 = vst [vmem:[%s381 + $0x40] sm:$0xff] %v662
        %665 = vst [vmem:[%s381 + $0x48] sm:$0xff] %v663
        %v666 = vld [vmem:[%s381 + $0x50] sm:$0xff]
        %v667 = vld [vmem:[%s381 + $0x58] sm:$0xff]
        %v668 = vadd.f32 %v666, %v634
        %v669 = vadd.f32 %v667, %v635
        %670 = vst [vmem:[%s381 + $0x50] sm:$0xff] %v668
        %671 = vst [vmem:[%s381 + $0x58] sm:$0xff] %v669
        %s672 = sand.u32 %s176, 1
        %s673 = scalar_lea.sflag [#allocation4], %s672
        %s674 = sand.u32 %s176, 1
        %s675 = smul.addr %s674, 96
        %s676 = scalar_lea.vmem [#allocation10], %s675
        // Predicated region
        $region57: #{tpu_custom_call.1} parent=35 // pred_check
          %p677 = pneg %p186
        $region58: #{tpu_custom_call.1} parent=35 // pred_check_branch
          %679 = sbr.rel (%p677) target = $region60
        $region59: #{tpu_custom_call.1} parent=35 // pred_region
          %s681 = ssub.s32 1536, 1536
          %682 = vsyncadd %s673, %s681
          %s683 = smul.addr %s33, 12
          %s684 = smul.addr %s32, 12
          %s685 = sadd.s32 %s683, %s684
          %s686 = smul.addr %s685, 128
          %s687 = scalar_lea.hbm %s4, %s686
          %s688 = sshll.u32 %s676, 4
          %s689 = int_to_ptr.vmem [resolvable:$true] %s688
          %694 = dma.vmem_to_hbm [thread:$0]  %s689, 1536, %s687, %s673, 128, 128, 8
        $region60: #{tpu_custom_call.1} parent=35 // pred_fallthru
          _
      $region36: #{tpu_custom_call.1} parent=5 // pred_fallthru
        _
      %p695 = scmp.le.s32.totalorder 2, %s22
      // Predicated region
      $region61: #{tpu_custom_call.1} parent=5 // pred_check
        %p696 = pneg %p695
      $region62: #{tpu_custom_call.1} parent=5 // pred_check_branch
        %698 = sbr.rel (%p696) target = $region64
      $region63: #{tpu_custom_call.1} parent=5 // pred_region
        %s699 = ssub.s32 %s22, 2
        // Predicated region
        $region65: #{tpu_custom_call.1} parent=63 // pred_check
          %p700 = pneg %p192
        $region66: #{tpu_custom_call.1} parent=63 // pred_check_branch
          %702 = sbr.rel (%p700) target = $region68
        $region67: #{tpu_custom_call.1} parent=63 // pred_region
          %s703 = sand.u32 %s177, 1
          %s704 = scalar_lea.sflag [#allocation4], %s703
          %s705 = sand.u32 %s177, 1
          %s706 = smul.addr %s705, 96
          %s707 = scalar_lea.vmem [#allocation10], %s706
          %708 = dma.done %s704, 1536
        $region68: #{tpu_custom_call.1} parent=63 // pred_fallthru
          _
      $region64: #{tpu_custom_call.1} parent=5 // pred_fallthru
        _
    $region6: #{tpu_custom_call.1} parent=1 // loop_footer
      %s26 = sadd.s32 1, %s22
    $region7: #{tpu_custom_call.1} parent=1 // loop_footer_branch
      %21 = sbr.rel target = $region3
    $region8: #{tpu_custom_call.1} parent=1 // loop_exit
      _
    %709 = vsyncpa [#allocation3], 1
    %s710 = scalar_lea.sflag [#allocation3], 1
    %711 = vsyncpa %s710, 1
    %712 = vsyncpa [#allocation6], 1
    %s713 = scalar_lea.sflag [#allocation6], 1
    %714 = vsyncpa %s713, 1
    %715 = vsyncpa [#allocation9], 1
    %s716 = scalar_lea.sflag [#allocation9], 1
    %717 = vsyncpa %s716, 1
    %718 = vsyncpa [#allocation4], 1
    %s719 = scalar_lea.sflag [#allocation4], 1
    %720 = vsyncpa %s719, 1

</llo_original>
